<compile_context>
chip_gen: v7x
topology: tpu7x:2x2x1
jax: 0.10.0
libtpu: 0.0.40
codegen_flags: <defaults>
</compile_context>

<pallas_src>
import jax
import jax.numpy as jnp
from jax.experimental import pallas as pl
from jax.experimental.pallas import tpu as pltpu

_LANE = 128
# Target f32 elements per input block (~2 MiB nominal, ~4 MiB double-buffered).
_TARGET_BLOCK_ELEMS = 512 * 1024


def _choose_row_block(r):
    """Largest multiple-of-8 divisor of r that still leaves >=2 row blocks
    (megacore-friendly); falls back to the full extent r (allowed by the
    (8,128) rule even when r is not a multiple of 8)."""
    cap = max(8, _TARGET_BLOCK_ELEMS // _LANE)
    divs = [d for d in range(8, min(r, cap) + 1, 8) if r % d == 0]
    if not divs:
        return r
    multi = [d for d in divs if r // d >= 2]
    return max(multi) if multi else max(divs)


def _make_kernel(hw, tile, n_s, needs_mask):
    """All sizes are static Python values closed over by the kernel."""
    last = n_s - 1

    def kernel(x_ref, out_ref, acc_ref):
        p = pl.program_id(1)   # parallel spatial partition
        s = pl.program_id(2)   # reduction step (innermost)

        @pl.when(s == 0)
        def _():
            acc_ref[...] = jnp.zeros_like(acc_ref)

        if needs_mask:
            start = (p * n_s + s) * tile

            # Hot path: fully in-bounds block, no mask.
            @pl.when(start + tile <= hw)
            def _():
                acc_ref[...] += jnp.sum(
                    x_ref[...], axis=-1, keepdims=True, dtype=jnp.float32)

            # Cold path: block overhangs hw (or is a phantom block); mask the
            # unspecified / duplicated lanes before accumulating.
            @pl.when(start + tile > hw)
            def _():
                x = x_ref[...]
                lane = jax.lax.broadcasted_iota(jnp.int32, x.shape, 1)
                valid = (start + lane) < hw
                xm = jnp.where(valid, x, jnp.zeros_like(x))
                acc_ref[...] += jnp.sum(
                    xm, axis=-1, keepdims=True, dtype=jnp.float32)
        else:
            acc_ref[...] += jnp.sum(
                x_ref[...], axis=-1, keepdims=True, dtype=jnp.float32)

        @pl.when(s == last)
        def _():
            out_ref[...] = acc_ref[...].reshape(out_ref.shape)

    return kernel


def color_constancy_loss(x):
    """Pallas implementation of ColorConstancyLoss.forward.

    Args:
      x: (B, 3, H, W) float array (NCHW).
    Returns:
      scalar float32 loss.
    """
    B, C, H, W = x.shape
    assert C == 3, "ColorConstancyLoss expects 3 channels (RGB)."
    hw = H * W
    R = B * C
    xf = x.reshape(R, hw)  # free metadata reshape on contiguous NCHW

    # Row (sublane) block.
    tr = _choose_row_block(R)
    n_r = pl.cdiv(R, tr)

    # Spatial (lane) tile: multiple of 128, sized so tr*tile ~ target, then
    # equalized so blocks are (near) evenly sized.
    hw_lanes = pl.cdiv(hw, _LANE) * _LANE
    row_budget = max(_LANE, (_TARGET_BLOCK_ELEMS // tr) // _LANE * _LANE)
    tile = min(hw_lanes, row_budget)
    n_blocks = pl.cdiv(hw, tile)
    tile = pl.cdiv(pl.cdiv(hw, n_blocks), _LANE) * _LANE
    n_blocks = pl.cdiv(hw, tile)

    # v7x megacore: if the row axis has a single block, split the spatial axis
    # into 2 parallel partitions (per-partition partial sums combined below).
    n_p = 2 if (n_r == 1 and n_blocks >= 2) else 1
    n_s = pl.cdiv(n_blocks, n_p)
    needs_mask = (n_p * n_s * tile != hw)
    phantom = n_p * n_s > n_blocks
    last_block = n_blocks - 1

    if phantom:
        def x_map(r, p, s):
            return (r, jnp.minimum(p * n_s + s, last_block))
    else:
        def x_map(r, p, s):
            return (r, p * n_s + s)

    def o_map(r, p, s):
        return (p, r, 0)

    kernel = _make_kernel(hw, tile, n_s, needs_mask)

    itemsize = jnp.dtype(x.dtype).itemsize
    cost = pl.CostEstimate(
        flops=int(xf.size),
        transcendentals=0,
        bytes_accessed=int(xf.size) * itemsize + n_p * R * 4,
    )

    partial = pl.pallas_call(
        kernel,
        out_shape=jax.ShapeDtypeStruct((n_p, R, 1), jnp.float32),
        grid=(n_r, n_p, n_s),
        in_specs=[pl.BlockSpec((tr, tile), x_map)],
        out_specs=pl.BlockSpec((1, tr, 1), o_map),
        scratch_shapes=[pltpu.VMEM((tr, 1), jnp.float32)],
        compiler_params=pltpu.CompilerParams(
            dimension_semantics=("parallel", "parallel", "arbitrary"),
            vmem_limit_bytes=48 * 1024 * 1024,
        ),
        cost_estimate=cost,
    )(xf)

    # Epilogue in the wrapper (4 flops per image + batch mean).
    row_sums = jnp.sum(partial, axis=0)[:, 0]             # (B*3,)
    means = row_sums.reshape(B, C) * (1.0 / float(hw))    # (B, 3)
    mr, mg, mb = means[:, 0], means[:, 1], means[:, 2]
    return jnp.mean((mr - mg) ** 2 + (mr - mb) ** 2 + (mb - mg) ** 2)


def _reference(x):
    """Plain-JAX reference matching the PyTorch forward exactly."""
    mean_rgb = jnp.mean(x, axis=(2, 3), keepdims=True)  # (B, 3, 1, 1)
    mr, mg, mb = mean_rgb[:, 0], mean_rgb[:, 1], mean_rgb[:, 2]
    drg = (mr - mg) ** 2
    drb = (mr - mb) ** 2
    dgb = (mb - mg) ** 2
    return jnp.mean(drg + drb + dgb)


if __name__ == "__main__":
    key = jax.random.PRNGKey(0)
    # Small deterministic input consistent with the module: NCHW, 3 channels.
    x = jax.random.uniform(key, (2, 3, 16, 16), dtype=jnp.float32)

    loss = jax.block_until_ready(color_constancy_loss(x))
    ref = jax.block_until_ready(_reference(x))
    assert jnp.allclose(loss, ref, rtol=1e-5, atol=1e-6), (loss, ref)

    print("KERNEL_OK")
</pallas_src>

<mosaic_0001>
module attributes {stable_mosaic.version = 11 : i64} {
  func.func @kernel(%arg0: i32, %arg1: i32, %arg2: i32, %arg3: memref<6x256xf32, #tpu.memory_space<vmem>>, %arg4: memref<1x6x1xf32, #tpu.memory_space<vmem>>, %arg5: memref<6x1xf32, #tpu.memory_space<vmem>>) attributes {dimension_semantics = [#tpu.dimension_semantics<parallel>, #tpu.dimension_semantics<parallel>, #tpu.dimension_semantics<arbitrary>], iteration_bounds = array<i64: 1, 1, 1>, scalar_prefetch = 0 : i64, scratch_operands = 1 : i64, tpu.core_type = #tpu.core_type<tc>, window_params = [{transform_indices = @transform_0, window_bounds = array<i64: 6, 256>}, {transform_indices = @transform_1, window_bounds = array<i64: 1, 6, 1>}]} {
    %c0_i32 = arith.constant 0 : i32
    %0 = arith.cmpi eq, %arg2, %c0_i32 : i32
    %1 = arith.extui %0 : i1 to i32
    %c0_i32_0 = arith.constant 0 : i32
    %2 = arith.cmpi ne, %1, %c0_i32_0 : i32
    scf.if %2 {
      %cst_8 = arith.constant 0.000000e+00 : f32
      %12 = vector.broadcast %cst_8 : f32 to vector<6x1xf32>
      %c0_9 = arith.constant 0 : index
      %c0_10 = arith.constant 0 : index
      %13 = vector.load %arg5[%c0_9, %c0_10] : memref<6x1xf32, #tpu.memory_space<vmem>>, vector<6x1xf32>
      tpu.vector_store %arg5[%c0_9, %c0_10], %12 {strides = array<i32>} : memref<6x1xf32, #tpu.memory_space<vmem>>, vector<6x1xf32>,
    } else {
    }
    %c0 = arith.constant 0 : index
    %c0_1 = arith.constant 0 : index
    %3 = vector.load %arg5[%c0, %c0_1] : memref<6x1xf32, #tpu.memory_space<vmem>>, vector<6x1xf32>
    %c0_2 = arith.constant 0 : index
    %c0_3 = arith.constant 0 : index
    %4 = vector.load %arg3[%c0_2, %c0_3] : memref<6x256xf32, #tpu.memory_space<vmem>>, vector<6x256xf32>
    %cst = arith.constant dense<0.000000e+00> : vector<6xf32>
    %5 = vector.multi_reduction <add>, %4, %cst [1] : vector<6x256xf32> to vector<6xf32>
    %6 = vector.shape_cast %5 : vector<6xf32> to vector<6x1xf32>
    %7 = arith.addf %3, %6 : vector<6x1xf32>
    %c0_4 = arith.constant 0 : index
    %c0_5 = arith.constant 0 : index
    %8 = vector.load %arg5[%c0_4, %c0_5] : memref<6x1xf32, #tpu.memory_space<vmem>>, vector<6x1xf32>
    tpu.vector_store %arg5[%c0_4, %c0_5], %7 {strides = array<i32>} : memref<6x1xf32, #tpu.memory_space<vmem>>, vector<6x1xf32>,
    %c0_i32_6 = arith.constant 0 : i32
    %9 = arith.cmpi eq, %arg2, %c0_i32_6 : i32
    %10 = arith.extui %9 : i1 to i32
    %c0_i32_7 = arith.constant 0 : i32
    %11 = arith.cmpi ne, %10, %c0_i32_7 : i32
    scf.if %11 {
      %c0_8 = arith.constant 0 : index
      %c0_9 = arith.constant 0 : index
      %12 = vector.load %arg5[%c0_8, %c0_9] : memref<6x1xf32, #tpu.memory_space<vmem>>, vector<6x1xf32>
      %13 = vector.shape_cast %12 : vector<6x1xf32> to vector<1x6x1xf32>
      %c0_10 = arith.constant 0 : index
      %c0_11 = arith.constant 0 : index
      %c0_12 = arith.constant 0 : index
      %14 = vector.load %arg4[%c0_10, %c0_11, %c0_12] : memref<1x6x1xf32, #tpu.memory_space<vmem>>, vector<1x6x1xf32>
      tpu.vector_store %arg4[%c0_10, %c0_11, %c0_12], %13 {strides = array<i32>} : memref<1x6x1xf32, #tpu.memory_space<vmem>>, vector<1x6x1xf32>,
    } else {
    }
    return
  }
  func.func @transform_0(%arg0: i32, %arg1: i32, %arg2: i32) -> (i32, i32) {
    %c1_i32 = arith.constant 1 : i32
    %0 = arith.muli %arg1, %c1_i32 : i32
    %1 = arith.addi %0, %arg2 : i32
    %c0_i32 = arith.constant 0 : i32
    return %arg0, %1 : i32, i32
  }
  func.func @transform_1(%arg0: i32, %arg1: i32, %arg2: i32) -> (i32, i32, i32) {
    %c0_i32 = arith.constant 0 : i32
    %c0_i32_0 = arith.constant 0 : i32
    return %arg1, %arg0, %c0_i32 : i32, i32, i32
  }
}

</mosaic_0001>

<llo_original>
// kernel: tpu_custom_call.1
$region0: #{tpu_custom_call.1}
  #allocation0 [shape = 'u32[]', space=smem, size = 0x4, offset = 0x4, fixed_abs, tag = 'smem constant byte address 0x4 - core index']
  #allocation1 [shape = 'u32[144,128]{1,0:T(1,128)}', space=vmem, size = 0x12000, scoped, tag = 'internal scratch']
  #allocation2 [shape = 'f32[6,1]{1,0:T(8,128)}', space=vmem, size = 0x1000, scoped, tag = 'scratch operand']
  %s0 = inlined_call_operand.hbm [shape: f32[6,256], index: 0, kind: input, shape index: {}]
  %s1 = inlined_call_operand.vmem [shape: f32[1,6,1], index: 1, kind: output, shape index: {}]
  %s2 = sld [smem:[#allocation0]]
  $region26: #{tpu_custom_call.1} parent=0
    _
  %s4 = ssub.s32 1, %s2
  %s5 = scalar_select 0, %s4, %s2
  $region1: #{tpu_custom_call.1} parent=0
    #allocation3 [shape = 'u8[8192]{0}', space=vmem, size = 0x2000, scoped, tag = 'input window, operand 0, single buffered']
    #allocation4 [shape = 's32[1]{0}', space=sflag, size = 0x4, scoped, tag = 'scoped memory for tpu_custom_call.1']
    %6 = vsyncpa [#allocation4], 0
    // Predicated region
    $region2: #{tpu_custom_call.1} parent=1 // pred_check
      _
    $region3: #{tpu_custom_call.1} parent=1 // pred_check_branch
      %8 = sbr.rel (0) target = $region5
    $region4: #{tpu_custom_call.1} parent=1 // pred_region
      %s9 = sadd.s32 0, 0
      %s10 = smul.u32 2, %s9
      %s12 = ssub.s32 256, 256
      %13 = vsyncadd [#allocation4], %s12
      %s14 = smul.addr %s10, 128
      %s15 = scalar_lea.hbm %s0, %s14
      %s17 = sshll.u32 [#allocation3], 4
      %s18 = int_to_ptr.vmem [resolvable:$true] %s17
      %20 = dma.hbm_to_vmem [thread:$0]  %s15, 256, %s18, [#allocation4]
    $region5: #{tpu_custom_call.1} parent=1 // pred_fallthru
      _
    // Predicated region
    $region6: #{tpu_custom_call.1} parent=1 // pred_check
      _
    $region7: #{tpu_custom_call.1} parent=1 // pred_check_branch
      %22 = sbr.rel (0) target = $region9
    $region8: #{tpu_custom_call.1} parent=1 // pred_region
      %23 = dma.done [#allocation4], 256
    $region9: #{tpu_custom_call.1} parent=1 // pred_fallthru
      _
    %s24 = sadd.s32 0, 0
    %s25 = smul.u32 2, %s24
    %p26 = scmp.eq.s32.totalorder 0, 0
    // Predicated region
    $region10: #{tpu_custom_call.1} parent=1 // pred_check
      %p27 = pneg %p26
    $region11: #{tpu_custom_call.1} parent=1 // pred_check_branch
      %29 = sbr.rel (%p27) target = $region13
    $region12: #{tpu_custom_call.1} parent=1 // pred_region
      %vm30 = vcmask 5120
      %31 = vst.msk [vmem:[#allocation2] sm:$0x3f] %vm30, 0.0
    $region13: #{tpu_custom_call.1} parent=1 // pred_fallthru
      _
    %v32 = vld [vmem:[#allocation2] sm:$0x3f]
    %v33 = vld [vmem:[#allocation3] sm:$0x3f]
    %v34 = vld [vmem:[#allocation3 + $0x8] sm:$0x3f]
    %vm35 = vcmask 1045504
    %v36 = vsel %vm35, %v33, 0.0
    %v37 = vsel %vm35, %v34, 0.0
    %v38 = vadd.f32 %v36, %v37
    %39 = vadd.xlane.f32.xlu0 %v38
    %v40 = vpop.xlane.xlu0 %39
    %v41 = vadd.f32 %v32, %v40
    %vm42 = vcmask 5120
    %43 = vst.msk [vmem:[#allocation2] sm:$0x3f] %vm42, %v41
    // Predicated region
    $region14: #{tpu_custom_call.1} parent=1 // pred_check
      %p44 = pneg %p26
    $region15: #{tpu_custom_call.1} parent=1 // pred_check_branch
      %46 = sbr.rel (%p44) target = $region17
    $region16: #{tpu_custom_call.1} parent=1 // pred_region
      %v47 = vld [vmem:[#allocation2] sm:$0x3f]
      %48 = vst.msk [vmem:[%s1] sm:$0x3f] %vm42, %v47
    $region17: #{tpu_custom_call.1} parent=1 // pred_fallthru
      _
    // Predicated region
    $region18: #{tpu_custom_call.1} parent=1 // pred_check
      _
    $region19: #{tpu_custom_call.1} parent=1 // pred_check_branch
      %50 = sbr.rel (0) target = $region21
    $region20: #{tpu_custom_call.1} parent=1 // pred_region
      _
    $region21: #{tpu_custom_call.1} parent=1 // pred_fallthru
      _
    // Predicated region
    $region22: #{tpu_custom_call.1} parent=1 // pred_check
      _
    $region23: #{tpu_custom_call.1} parent=1 // pred_check_branch
      %52 = sbr.rel (0) target = $region25
    $region24: #{tpu_custom_call.1} parent=1 // pred_region
      _
    $region25: #{tpu_custom_call.1} parent=1 // pred_fallthru
      _
    %53 = vsyncpa [#allocation4], 1

</llo_original>
